<compile_context>
chip_gen: v7x
topology: tpu7x:2x2x1
jax: 0.10.0
libtpu: 0.0.40
codegen_flags: <defaults>
</compile_context>

<pallas_src>
import jax
import jax.numpy as jnp
from jax.experimental import pallas as pl
from jax.experimental.pallas import tpu as pltpu


NUM_LAYERS = 6
LAYER_DIMS = [75, 128, 128, 64, 32, 16, 7]   # mlp1..mlp6
IN_DIM = LAYER_DIMS[0]                       # 75
OUT_DIM = LAYER_DIMS[-1]                     # 7
PAD = 128                                    # lane-dense feature width
WEIGHT_DTYPE = jnp.bfloat16                  # MXU operand dtype

SMALL_BATCH_MAX = 512                        # gridless single-tile path up to here
MAX_TILE_B = 1024                            # batch tile cap for the gridded path
TILE_B_GRANULE = 256


def _round_up(n, m):
    return -(-n // m) * m


# ---------------------------------------------------------------------------
# Fused MLP kernel: 6 uniform (TB,128)x(128,128) bf16 MXU passes, unrolled.
#   y_ref   : (TB, 75)  f32   activation block
#   w_ref   : (6, 128, 128) bf16  zero-padded weight slab (VMEM-resident)
#   b_ref   : (6, 1, 128)   f32   zero-padded bias slab   (VMEM-resident)
#   out_ref : (TB, 7)   f32   only the live logits are written back
#   xpad_ref: (TB, 128) f32   scratch used to lane-pad the input to 128
# Padded lanes stay exactly zero through the whole chain (zero weight rows /
# cols, zero bias lanes, ReLU(0)=0), so the 7 live lanes are unchanged.
# ---------------------------------------------------------------------------
def _mlp_kernel(y_ref, w_ref, b_ref, out_ref, xpad_ref):
    # Build the 128-lane input tile: zero everything (so stale scratch /
    # NaN garbage can never reach the MXU), then masked-store the 75 live lanes.
    xpad_ref[...] = jnp.zeros_like(xpad_ref)
    xpad_ref[:, :IN_DIM] = y_ref[...]

    h = xpad_ref[...].astype(w_ref.dtype)          # (TB, 128) bf16
    z = None
    for i in range(NUM_LAYERS):                    # fully unrolled: 6 MXU passes
        z = jnp.dot(h, w_ref[i],                   # bf16 x bf16 -> f32 acc
                    preferred_element_type=jnp.float32)
        z = z + b_ref[i]                           # (1, 128) f32 bias broadcast
        if i < NUM_LAYERS - 1:
            h = jnp.maximum(z, 0.0).astype(w_ref.dtype)   # bf16 carry
    # mlp6: no activation; store only the 7 live lanes (narrow HBM writeback).
    out_ref[...] = z[:, :OUT_DIM].astype(out_ref.dtype)


# ---------------------------------------------------------------------------
# Host-side parameter packing: 12 small arrays -> 2 zero-padded slabs.
# ---------------------------------------------------------------------------
def pack_params(params, weight_dtype=WEIGHT_DTYPE):
    """params: list of 6 (w, b) with w (in_features, out_features), b (1,out) or (out,)."""
    w_slab = jnp.zeros((NUM_LAYERS, PAD, PAD), weight_dtype)
    b_slab = jnp.zeros((NUM_LAYERS, 1, PAD), jnp.float32)
    for i, (w, b) in enumerate(params):
        fi, fo = w.shape
        w_slab = w_slab.at[i, :fi, :fo].set(w.astype(weight_dtype))
        b_slab = b_slab.at[i, 0, :fo].set(b.reshape(-1).astype(jnp.float32))
    return w_slab, b_slab


def _pick_tile_b(B):
    """Batch tile: multiple of 256, capped at MAX_TILE_B, and chosen so the
    grid has at least 2 blocks (keeps both v7x TensorCores busy)."""
    t = _round_up(pl.cdiv(B, 2), TILE_B_GRANULE)
    return max(TILE_B_GRANULE, min(MAX_TILE_B, t))


# ---------------------------------------------------------------------------
# Forward wrapper (same signature shape as the PyTorch forward(x, y)).
# ---------------------------------------------------------------------------
def skel_encoding_linear_forward(x, y, w_slab, b_slab, *, tile_b=None):
    """x: Face image input (dead code in the reference forward; unused).
    y: (B, 25, 3) or (B, 75).  Returns (B, 7) float32 logits."""
    del x  # Face(x), cat, softmax are dead code in the reference forward().

    y2d = y.reshape(-1, IN_DIM).astype(jnp.float32)
    B = y2d.shape[0]

    slab_bytes = (w_slab.size * w_slab.dtype.itemsize
                  + b_slab.size * b_slab.dtype.itemsize)
    cost = pl.CostEstimate(
        flops=2 * B * NUM_LAYERS * PAD * PAD,
        transcendentals=0,
        bytes_accessed=B * IN_DIM * 4 + B * OUT_DIM * 4 + slab_bytes,
    )

    if tile_b is None and B <= SMALL_BATCH_MAX:
        # --- small batch: single tile, no grid, everything VMEM-resident ----
        return pl.pallas_call(
            _mlp_kernel,
            out_shape=jax.ShapeDtypeStruct((B, OUT_DIM), jnp.float32),
            in_specs=[
                pl.BlockSpec(memory_space=pltpu.MemorySpace.VMEM),
                pl.BlockSpec(memory_space=pltpu.MemorySpace.VMEM),
                pl.BlockSpec(memory_space=pltpu.MemorySpace.VMEM),
            ],
            out_specs=pl.BlockSpec(memory_space=pltpu.MemorySpace.VMEM),
            scratch_shapes=[pltpu.VMEM((B, PAD), jnp.float32)],
            cost_estimate=cost,
        )(y2d, w_slab, b_slab)

    # --- large batch: tile the batch axis; weights/biases stay resident -----
    if tile_b is None:
        tile_b = _pick_tile_b(B)
    else:
        tile_b = max(8, _round_up(int(tile_b), 8))
    nb = pl.cdiv(B, tile_b)   # non-divisible edge block is masked by Pallas

    return pl.pallas_call(
        _mlp_kernel,
        out_shape=jax.ShapeDtypeStruct((B, OUT_DIM), jnp.float32),
        grid=(nb,),
        in_specs=[
            # last block dim == full array dim (75), so (tile_b, 75) is legal
            pl.BlockSpec((tile_b, IN_DIM), lambda i: (i, 0)),
            # constant block index => single DMA, VMEM-resident across steps
            pl.BlockSpec((NUM_LAYERS, PAD, PAD), lambda i: (0, 0, 0)),
            pl.BlockSpec((NUM_LAYERS, 1, PAD), lambda i: (0, 0, 0)),
        ],
        out_specs=pl.BlockSpec((tile_b, OUT_DIM), lambda i: (i, 0)),
        scratch_shapes=[pltpu.VMEM((tile_b, PAD), jnp.float32)],
        compiler_params=pltpu.CompilerParams(
            dimension_semantics=("parallel",)),   # both v7x TCs split blocks
        cost_estimate=cost,
    )(y2d, w_slab, b_slab)


# ---------------------------------------------------------------------------
# Deterministic parameter init (PyTorch nn.Linear style: U(-1/sqrt(fan_in), +)).
# Weights stored as (in_features, out_features).
# ---------------------------------------------------------------------------
def init_params(key):
    params = []
    for i in range(NUM_LAYERS):
        fan_in, fan_out = LAYER_DIMS[i], LAYER_DIMS[i + 1]
        key, kw, kb = jax.random.split(key, 3)
        bound = 1.0 / (fan_in ** 0.5)
        w = jax.random.uniform(kw, (fan_in, fan_out), jnp.float32, -bound, bound)
        b = jax.random.uniform(kb, (1, fan_out), jnp.float32, -bound, bound)
        params.append((w, b))
    return params


# ---------------------------------------------------------------------------
# References for the numerical checks.
# ---------------------------------------------------------------------------
def _reference_forward_f32(y, params):
    """Pure-f32 plain-JAX reference (mirrors the PyTorch live path)."""
    h = y.reshape(-1, IN_DIM).astype(jnp.float32)
    for i, (w, b) in enumerate(params):
        h = h @ w + b
        if i < NUM_LAYERS - 1:
            h = jnp.maximum(h, 0.0)
    return h


def _reference_forward_packed(y, w_slab, b_slab):
    """Plain-JAX mirror of the exact kernel math (padded slabs, bf16 operands,
    bf16 inter-layer carry, f32 accumulation)."""
    y2d = y.reshape(-1, IN_DIM).astype(jnp.float32)
    B = y2d.shape[0]
    h = jnp.zeros((B, PAD), jnp.float32).at[:, :IN_DIM].set(y2d)
    h = h.astype(w_slab.dtype)
    z = None
    for i in range(NUM_LAYERS):
        z = jnp.dot(h, w_slab[i], preferred_element_type=jnp.float32) + b_slab[i]
        if i < NUM_LAYERS - 1:
            h = jnp.maximum(z, 0.0).astype(w_slab.dtype)
    return z[:, :OUT_DIM]


if __name__ == "__main__":
    key = jax.random.PRNGKey(0)
    kp, kx, ky, kyb = jax.random.split(key, 4)

    params = init_params(kp)
    w_slab, b_slab = pack_params(params)

    # x is the "Face" image input from the reference signature; its
    # contribution is dead code in forward(), so it is shape-fidelity only.
    x = jax.random.normal(kx, (2, 3, 16, 16), jnp.float32)   # unused by output
    y = jax.random.normal(ky, (2, 25, 3), jnp.float32)       # skeleton input

    # --- small-batch (gridless) path ---------------------------------------
    out = skel_encoding_linear_forward(x, y, w_slab, b_slab)
    out = jax.block_until_ready(out)
    assert out.shape == (2, OUT_DIM), out.shape

    ref_exact = _reference_forward_packed(y, w_slab, b_slab)   # same bf16 math
    ref_f32 = _reference_forward_f32(y, params)                # full f32 path
    assert jnp.allclose(out, ref_exact, atol=1e-3, rtol=1e-3), \
        "mismatch vs packed (bf16-operand) reference"
    assert jnp.allclose(out, ref_f32, atol=5e-2, rtol=5e-2), \
        "mismatch vs f32 reference beyond bf16 tolerance"

    # --- large-batch (batch-tiled, parallel grid, masked edge block) --------
    y_big = jax.random.normal(kyb, (600, 25, 3), jnp.float32)
    out_big = skel_encoding_linear_forward(x, y_big, w_slab, b_slab)
    out_big = jax.block_until_ready(out_big)
    ref_big = _reference_forward_packed(y_big, w_slab, b_slab)
    assert out_big.shape == (600, OUT_DIM), out_big.shape
    assert jnp.allclose(out_big, ref_big, atol=1e-3, rtol=1e-3), \
        "tiled path mismatch vs packed reference"

    print("KERNEL_OK")
</pallas_src>

<mosaic_0001>
module attributes {stable_mosaic.version = 11 : i64} {
  func.func @_mlp_kernel(%arg0: memref<2x75xf32, #tpu.memory_space<vmem>>, %arg1: memref<6x128x128xbf16, #tpu.memory_space<vmem>>, %arg2: memref<6x1x128xf32, #tpu.memory_space<vmem>>, %arg3: memref<2x7xf32, #tpu.memory_space<vmem>>, %arg4: memref<2x128xf32, #tpu.memory_space<vmem>>) attributes {dimension_semantics = [], scalar_prefetch = 0 : i64, scratch_operands = 1 : i64, tpu.core_type = #tpu.core_type<tc>} {
    %cst = arith.constant 0.000000e+00 : f32
    %0 = vector.broadcast %cst : f32 to vector<2x128xf32>
    %c0 = arith.constant 0 : index
    %c0_0 = arith.constant 0 : index
    %1 = vector.load %arg4[%c0, %c0_0] : memref<2x128xf32, #tpu.memory_space<vmem>>, vector<2x128xf32>
    tpu.vector_store %arg4[%c0, %c0_0], %0 {strides = array<i32>} : memref<2x128xf32, #tpu.memory_space<vmem>>, vector<2x128xf32>,
    %c0_1 = arith.constant 0 : index
    %c0_2 = arith.constant 0 : index
    %2 = vector.load %arg0[%c0_1, %c0_2] : memref<2x75xf32, #tpu.memory_space<vmem>>, vector<2x75xf32>
    %c0_3 = arith.constant 0 : index
    %c0_4 = arith.constant 0 : index
    %3 = vector.load %arg4[%c0_3, %c0_4] : memref<2x128xf32, #tpu.memory_space<vmem>>, vector<2x75xf32>
    tpu.vector_store %arg4[%c0_3, %c0_4], %2 {strides = array<i32>} : memref<2x128xf32, #tpu.memory_space<vmem>>, vector<2x75xf32>,
    %c0_5 = arith.constant 0 : index
    %c0_6 = arith.constant 0 : index
    %4 = vector.load %arg4[%c0_5, %c0_6] : memref<2x128xf32, #tpu.memory_space<vmem>>, vector<2x128xf32>
    %5 = arith.truncf %4 : vector<2x128xf32> to vector<2x128xbf16>
    %c0_7 = arith.constant 0 : index
    %c0_8 = arith.constant 0 : index
    %c0_9 = arith.constant 0 : index
    %6 = vector.load %arg1[%c0_7, %c0_8, %c0_9] : memref<6x128x128xbf16, #tpu.memory_space<vmem>>, vector<1x128x128xbf16>
    %7 = vector.shape_cast %6 : vector<1x128x128xbf16> to vector<128x128xbf16>
    %cst_10 = arith.constant dense<0.000000e+00> : vector<2x128xf32>
    %8 = tpu.matmul %5, %7, %cst_10 {dimension_numbers = #tpu.dot_dimension_numbers<[1], [0], [0], [1], [0, 0, 1, 1], [], []>} : vector<2x128xbf16>, vector<128x128xbf16>, vector<2x128xf32> -> vector<2x128xf32>
    %c0_11 = arith.constant 0 : index
    %c0_12 = arith.constant 0 : index
    %c0_13 = arith.constant 0 : index
    %9 = vector.load %arg2[%c0_11, %c0_12, %c0_13] : memref<6x1x128xf32, #tpu.memory_space<vmem>>, vector<1x1x128xf32>
    %10 = vector.shape_cast %9 : vector<1x1x128xf32> to vector<1x128xf32>
    %11 = vector.broadcast %10 : vector<1x128xf32> to vector<2x128xf32>
    %12 = arith.addf %8, %11 : vector<2x128xf32>
    %cst_14 = arith.constant 0.000000e+00 : f32
    %13 = vector.broadcast %cst_14 : f32 to vector<2x128xf32>
    %14 = arith.maximumf %12, %13 : vector<2x128xf32>
    %15 = arith.truncf %14 : vector<2x128xf32> to vector<2x128xbf16>
    %c1 = arith.constant 1 : index
    %c0_15 = arith.constant 0 : index
    %c0_16 = arith.constant 0 : index
    %16 = vector.load %arg1[%c1, %c0_15, %c0_16] : memref<6x128x128xbf16, #tpu.memory_space<vmem>>, vector<1x128x128xbf16>
    %17 = vector.shape_cast %16 : vector<1x128x128xbf16> to vector<128x128xbf16>
    %cst_17 = arith.constant dense<0.000000e+00> : vector<2x128xf32>
    %18 = tpu.matmul %15, %17, %cst_17 {dimension_numbers = #tpu.dot_dimension_numbers<[1], [0], [0], [1], [0, 0, 1, 1], [], []>} : vector<2x128xbf16>, vector<128x128xbf16>, vector<2x128xf32> -> vector<2x128xf32>
    %c1_18 = arith.constant 1 : index
    %c0_19 = arith.constant 0 : index
    %c0_20 = arith.constant 0 : index
    %19 = vector.load %arg2[%c1_18, %c0_19, %c0_20] : memref<6x1x128xf32, #tpu.memory_space<vmem>>, vector<1x1x128xf32>
    %20 = vector.shape_cast %19 : vector<1x1x128xf32> to vector<1x128xf32>
    %21 = vector.broadcast %20 : vector<1x128xf32> to vector<2x128xf32>
    %22 = arith.addf %18, %21 : vector<2x128xf32>
    %cst_21 = arith.constant 0.000000e+00 : f32
    %23 = vector.broadcast %cst_21 : f32 to vector<2x128xf32>
    %24 = arith.maximumf %22, %23 : vector<2x128xf32>
    %25 = arith.truncf %24 : vector<2x128xf32> to vector<2x128xbf16>
    %c2 = arith.constant 2 : index
    %c0_22 = arith.constant 0 : index
    %c0_23 = arith.constant 0 : index
    %26 = vector.load %arg1[%c2, %c0_22, %c0_23] : memref<6x128x128xbf16, #tpu.memory_space<vmem>>, vector<1x128x128xbf16>
    %27 = vector.shape_cast %26 : vector<1x128x128xbf16> to vector<128x128xbf16>
    %cst_24 = arith.constant dense<0.000000e+00> : vector<2x128xf32>
    %28 = tpu.matmul %25, %27, %cst_24 {dimension_numbers = #tpu.dot_dimension_numbers<[1], [0], [0], [1], [0, 0, 1, 1], [], []>} : vector<2x128xbf16>, vector<128x128xbf16>, vector<2x128xf32> -> vector<2x128xf32>
    %c2_25 = arith.constant 2 : index
    %c0_26 = arith.constant 0 : index
    %c0_27 = arith.constant 0 : index
    %29 = vector.load %arg2[%c2_25, %c0_26, %c0_27] : memref<6x1x128xf32, #tpu.memory_space<vmem>>, vector<1x1x128xf32>
    %30 = vector.shape_cast %29 : vector<1x1x128xf32> to vector<1x128xf32>
    %31 = vector.broadcast %30 : vector<1x128xf32> to vector<2x128xf32>
    %32 = arith.addf %28, %31 : vector<2x128xf32>
    %cst_28 = arith.constant 0.000000e+00 : f32
    %33 = vector.broadcast %cst_28 : f32 to vector<2x128xf32>
    %34 = arith.maximumf %32, %33 : vector<2x128xf32>
    %35 = arith.truncf %34 : vector<2x128xf32> to vector<2x128xbf16>
    %c3 = arith.constant 3 : index
    %c0_29 = arith.constant 0 : index
    %c0_30 = arith.constant 0 : index
    %36 = vector.load %arg1[%c3, %c0_29, %c0_30] : memref<6x128x128xbf16, #tpu.memory_space<vmem>>, vector<1x128x128xbf16>
    %37 = vector.shape_cast %36 : vector<1x128x128xbf16> to vector<128x128xbf16>
    %cst_31 = arith.constant dense<0.000000e+00> : vector<2x128xf32>
    %38 = tpu.matmul %35, %37, %cst_31 {dimension_numbers = #tpu.dot_dimension_numbers<[1], [0], [0], [1], [0, 0, 1, 1], [], []>} : vector<2x128xbf16>, vector<128x128xbf16>, vector<2x128xf32> -> vector<2x128xf32>
    %c3_32 = arith.constant 3 : index
    %c0_33 = arith.constant 0 : index
    %c0_34 = arith.constant 0 : index
    %39 = vector.load %arg2[%c3_32, %c0_33, %c0_34] : memref<6x1x128xf32, #tpu.memory_space<vmem>>, vector<1x1x128xf32>
    %40 = vector.shape_cast %39 : vector<1x1x128xf32> to vector<1x128xf32>
    %41 = vector.broadcast %40 : vector<1x128xf32> to vector<2x128xf32>
    %42 = arith.addf %38, %41 : vector<2x128xf32>
    %cst_35 = arith.constant 0.000000e+00 : f32
    %43 = vector.broadcast %cst_35 : f32 to vector<2x128xf32>
    %44 = arith.maximumf %42, %43 : vector<2x128xf32>
    %45 = arith.truncf %44 : vector<2x128xf32> to vector<2x128xbf16>
    %c4 = arith.constant 4 : index
    %c0_36 = arith.constant 0 : index
    %c0_37 = arith.constant 0 : index
    %46 = vector.load %arg1[%c4, %c0_36, %c0_37] : memref<6x128x128xbf16, #tpu.memory_space<vmem>>, vector<1x128x128xbf16>
    %47 = vector.shape_cast %46 : vector<1x128x128xbf16> to vector<128x128xbf16>
    %cst_38 = arith.constant dense<0.000000e+00> : vector<2x128xf32>
    %48 = tpu.matmul %45, %47, %cst_38 {dimension_numbers = #tpu.dot_dimension_numbers<[1], [0], [0], [1], [0, 0, 1, 1], [], []>} : vector<2x128xbf16>, vector<128x128xbf16>, vector<2x128xf32> -> vector<2x128xf32>
    %c4_39 = arith.constant 4 : index
    %c0_40 = arith.constant 0 : index
    %c0_41 = arith.constant 0 : index
    %49 = vector.load %arg2[%c4_39, %c0_40, %c0_41] : memref<6x1x128xf32, #tpu.memory_space<vmem>>, vector<1x1x128xf32>
    %50 = vector.shape_cast %49 : vector<1x1x128xf32> to vector<1x128xf32>
    %51 = vector.broadcast %50 : vector<1x128xf32> to vector<2x128xf32>
    %52 = arith.addf %48, %51 : vector<2x128xf32>
    %cst_42 = arith.constant 0.000000e+00 : f32
    %53 = vector.broadcast %cst_42 : f32 to vector<2x128xf32>
    %54 = arith.maximumf %52, %53 : vector<2x128xf32>
    %55 = arith.truncf %54 : vector<2x128xf32> to vector<2x128xbf16>
    %c5 = arith.constant 5 : index
    %c0_43 = arith.constant 0 : index
    %c0_44 = arith.constant 0 : index
    %56 = vector.load %arg1[%c5, %c0_43, %c0_44] : memref<6x128x128xbf16, #tpu.memory_space<vmem>>, vector<1x128x128xbf16>
    %57 = vector.shape_cast %56 : vector<1x128x128xbf16> to vector<128x128xbf16>
    %cst_45 = arith.constant dense<0.000000e+00> : vector<2x128xf32>
    %58 = tpu.matmul %55, %57, %cst_45 {dimension_numbers = #tpu.dot_dimension_numbers<[1], [0], [0], [1], [0, 0, 1, 1], [], []>} : vector<2x128xbf16>, vector<128x128xbf16>, vector<2x128xf32> -> vector<2x128xf32>
    %c5_46 = arith.constant 5 : index
    %c0_47 = arith.constant 0 : index
    %c0_48 = arith.constant 0 : index
    %59 = vector.load %arg2[%c5_46, %c0_47, %c0_48] : memref<6x1x128xf32, #tpu.memory_space<vmem>>, vector<1x1x128xf32>
    %60 = vector.shape_cast %59 : vector<1x1x128xf32> to vector<1x128xf32>
    %61 = vector.broadcast %60 : vector<1x128xf32> to vector<2x128xf32>
    %62 = arith.addf %58, %61 : vector<2x128xf32>
    %63 = vector.extract_strided_slice %62 {offsets = [0, 0], sizes = [2, 7], strides = [1, 1]} : vector<2x128xf32> to vector<2x7xf32>
    %c0_49 = arith.constant 0 : index
    %c0_50 = arith.constant 0 : index
    %64 = vector.load %arg3[%c0_49, %c0_50] : memref<2x7xf32, #tpu.memory_space<vmem>>, vector<2x7xf32>
    tpu.vector_store %arg3[%c0_49, %c0_50], %63 {strides = array<i32>} : memref<2x7xf32, #tpu.memory_space<vmem>>, vector<2x7xf32>,
    return
  }
}

</mosaic_0001>

<llo_original>
// kernel: tpu_custom_call.1
$region0: #{tpu_custom_call.1}
  #allocation0 [shape = 'u32[]', space=smem, size = 0x4, offset = 0x4, fixed_abs, tag = 'smem constant byte address 0x4 - core index']
  #allocation1 [shape = 'u32[144,128]{1,0:T(1,128)}', space=vmem, size = 0x12000, scoped, tag = 'internal scratch']
  #allocation2 [shape = 'f32[2,128]{1,0:T(2,128)}', space=vmem, size = 0x400, scoped, tag = 'scratch operand']
  %s0 = inlined_call_operand.hbm [shape: f32[2,75], index: 0, kind: input, shape index: {}]
  %s1 = inlined_call_operand.hbm [shape: bf16[6,128,128], index: 1, kind: input, shape index: {}]
  %s2 = inlined_call_operand.vmem [shape: f32[6,1,128], index: 2, kind: input, shape index: {}]
  %s3 = inlined_call_operand.hbm [shape: f32[2,7], index: 3, kind: output, shape index: {}]
  %s4 = sld [smem:[#allocation0]]
  $region30: #{tpu_custom_call.1} parent=0
    _
  %s6 = ssub.s32 1, %s4
  %s7 = scalar_select 0, %s6, %s4
  $region1: #{tpu_custom_call.1} parent=0
    #allocation3 [shape = 'u8[1024]{0}', space=vmem, size = 0x400, scoped, tag = 'input window, operand 0, single buffered']
    #allocation4 [shape = 's32[1]{0}', space=sflag, size = 0x4, scoped, tag = 'scoped memory for tpu_custom_call.1']
    #allocation5 [shape = 's32[1]{0}', space=sflag, size = 0x4, scoped, tag = 'scoped memory for tpu_custom_call.1']
    #allocation6 [shape = 'u8[196608]{0}', space=vmem, size = 0x30000, scoped, tag = 'input window, operand 1, single buffered']
    #allocation7 [shape = 's32[1]{0}', space=sflag, size = 0x4, scoped, tag = 'scoped memory for tpu_custom_call.1']
    #allocation8 [shape = 'u8[1024]{0}', space=vmem, size = 0x400, scoped, tag = 'output window, operand 0, single buffered']
    %8 = vsyncpa [#allocation4], 0
    %9 = vsyncpa [#allocation7], 0
    %10 = vsyncpa [#allocation5], 0
    // Predicated region
    $region2: #{tpu_custom_call.1} parent=1 // pred_check
      _
    $region3: #{tpu_custom_call.1} parent=1 // pred_check_branch
      %12 = sbr.rel (0) target = $region5
    $region4: #{tpu_custom_call.1} parent=1 // pred_region
      %s14 = ssub.s32 32, 32
      %15 = vsyncadd [#allocation4], %s14
      %s17 = sshll.u32 [#allocation3], 4
      %s18 = int_to_ptr.vmem [resolvable:$true] %s17
      %20 = dma.hbm_to_vmem [thread:$0]  %s0, 32, %s18, [#allocation4]
    $region5: #{tpu_custom_call.1} parent=1 // pred_fallthru
      _
    // Predicated region
    $region6: #{tpu_custom_call.1} parent=1 // pred_check
      _
    $region7: #{tpu_custom_call.1} parent=1 // pred_check_branch
      %22 = sbr.rel (0) target = $region9
    $region8: #{tpu_custom_call.1} parent=1 // pred_region
      %s24 = ssub.s32 6144, 6144
      %25 = vsyncadd [#allocation7], %s24
      %s26 = sshll.u32 [#allocation6], 4
      %s27 = int_to_ptr.vmem [resolvable:$true] %s26
      %32 = dma.hbm_to_vmem [thread:$0]  %s1, 6144, %s27, [#allocation7], 64, 64, 4
    $region9: #{tpu_custom_call.1} parent=1 // pred_fallthru
      _
    // Predicated region
    $region10: #{tpu_custom_call.1} parent=1 // pred_check
      _
    $region11: #{tpu_custom_call.1} parent=1 // pred_check_branch
      %34 = sbr.rel (0) target = $region13
    $region12: #{tpu_custom_call.1} parent=1 // pred_region
      _
    $region13: #{tpu_custom_call.1} parent=1 // pred_fallthru
      _
    // Predicated region
    $region14: #{tpu_custom_call.1} parent=1 // pred_check
      _
    $region15: #{tpu_custom_call.1} parent=1 // pred_check_branch
      %36 = sbr.rel (0) target = $region17
    $region16: #{tpu_custom_call.1} parent=1 // pred_region
      %37 = dma.done [#allocation4], 32
    $region17: #{tpu_custom_call.1} parent=1 // pred_fallthru
      _
    // Predicated region
    $region18: #{tpu_custom_call.1} parent=1 // pred_check
      _
    $region19: #{tpu_custom_call.1} parent=1 // pred_check_branch
      %39 = sbr.rel (0) target = $region21
    $region20: #{tpu_custom_call.1} parent=1 // pred_region
      %40 = dma.done [#allocation7], 6144
    $region21: #{tpu_custom_call.1} parent=1 // pred_fallthru
      _
    %42 = vst [vmem:[#allocation2] sm:$0x3] 0.0
    %v43 = vld [vmem:[#allocation3] sm:$0x3]
    %vm44 = vcmask 607232
    %45 = vst.msk [vmem:[#allocation2] sm:$0x3] %vm44, %v43
    %v46 = vld [vmem:[#allocation2] sm:$0x3]
    %v47 = vpack.c.bf16 %v46, %v46
    %v48 = vld [vmem:[#allocation6] sm:$0xf]
    %v49 = vld [vmem:[#allocation6 + $0x4] sm:$0xf]
    %v50 = vld [vmem:[#allocation6 + $0x8] sm:$0xf]
    %v51 = vld [vmem:[#allocation6 + $0xc] sm:$0xf]
    %v52 = vld [vmem:[#allocation6 + $0x10] sm:$0xf]
    %v53 = vld [vmem:[#allocation6 + $0x14] sm:$0xf]
    %v54 = vld [vmem:[#allocation6 + $0x18] sm:$0xf]
    %v55 = vld [vmem:[#allocation6 + $0x1c] sm:$0xf]
    %v56 = vld [vmem:[#allocation6 + $0x20] sm:$0xf]
    %v57 = vld [vmem:[#allocation6 + $0x24] sm:$0xf]
    %v58 = vld [vmem:[#allocation6 + $0x28] sm:$0xf]
    %v59 = vld [vmem:[#allocation6 + $0x2c] sm:$0xf]
    %v60 = vld [vmem:[#allocation6 + $0x30] sm:$0xf]
    %v61 = vld [vmem:[#allocation6 + $0x34] sm:$0xf]
    %v62 = vld [vmem:[#allocation6 + $0x38] sm:$0xf]
    %v63 = vld [vmem:[#allocation6 + $0x3c] sm:$0xf]
    %v64 = vld [vmem:[%s2] sm:$0x1]
    %v66 = vlaneseq
    %v67 = vshrl.u32 %v66, 7
    %v68 = vsub.s32 0, %v67
    %v69 = vrot.slane %v64, %v68
    %v87 = vunpack.c.l.b16 %v48
    %v88 = vunpack.c.l.b16 %v49
    %v89 = vunpack.c.l.b16 %v50
    %v90 = vunpack.c.l.b16 %v51
    %v91 = vunpack.c.l.b16 %v52
    %v92 = vunpack.c.l.b16 %v53
    %v93 = vunpack.c.l.b16 %v54
    %v94 = vunpack.c.l.b16 %v55
    %v95 = vunpack.c.l.b16 %v56
    %v96 = vunpack.c.l.b16 %v57
    %v97 = vunpack.c.l.b16 %v58
    %v98 = vunpack.c.l.b16 %v59
    %v99 = vunpack.c.l.b16 %v60
    %v100 = vunpack.c.l.b16 %v61
    %v101 = vunpack.c.l.b16 %v62
    %v102 = vunpack.c.l.b16 %v63
    %v103 = vpack.c.b16 %v88, %v87
    %v104 = vpack.c.b16 %v90, %v89
    %v105 = vpack.c.b16 %v92, %v91
    %v106 = vpack.c.b16 %v94, %v93
    %v107 = vpack.c.b16 %v96, %v95
    %v108 = vpack.c.b16 %v98, %v97
    %v109 = vpack.c.b16 %v100, %v99
    %v110 = vpack.c.b16 %v102, %v101
    %119 = vmatprep.subr.bf16.mxu0 0
    %120 = vmatpush1.bf16.msra.mxu0 %v103
    %121 = vmatprep.subr.bf16.mxu0 0
    %122 = vmatpush1.bf16.msra.mxu0 %v104
    %123 = vmatprep.subr.bf16.mxu0 0
    %124 = vmatpush1.bf16.msra.mxu0 %v105
    %125 = vmatprep.subr.bf16.mxu0 0
    %126 = vmatpush1.bf16.msra.mxu0 %v106
    %127 = vmatprep.subr.bf16.mxu0 0
    %128 = vmatpush1.bf16.msra.mxu0 %v107
    %129 = vmatprep.subr.bf16.mxu0 0
    %130 = vmatpush1.bf16.msra.mxu0 %v108
    %131 = vmatprep.subr.bf16.mxu0 0
    %132 = vmatpush1.bf16.msra.mxu0 %v109
    %133 = vmatprep.subr.bf16.mxu0 0
    %134 = vmatpush1.bf16.msra.mxu0 %v110
    %135 = vmatprep.subr.bf16.mxu0 0
    %136 = vmatpush1.bf16.msra.mxu0 0
    %137 = vmatprep.subr.bf16.mxu0 0
    %138 = vmatpush1.bf16.msra.mxu0 0
    %139 = vmatprep.subr.bf16.mxu0 0
    %140 = vmatpush1.bf16.msra.mxu0 0
    %141 = vmatprep.subr.bf16.mxu0 0
    %142 = vmatpush1.bf16.msra.mxu0 0
    %143 = vmatprep.subr.bf16.mxu0 0
    %144 = vmatpush1.bf16.msra.mxu0 0
    %145 = vmatprep.subr.bf16.mxu0 0
    %146 = vmatpush1.bf16.msra.mxu0 0
    %147 = vmatprep.subr.bf16.mxu0 0
    %148 = vmatpush1.bf16.msra.mxu0 0
    %149 = vmatprep.subr.bf16.mxu0 0
    %150 = vmatpush1.bf16.msra.mxu0 0
    %151 = vmatprep.mubr.bf16.mxu0 0
    %152 = vmatmul.mubr.bf16.gmra.mrb[0].mxu0 %v47
    %v153 = vpop.f32.mrb[0].mxu0
    %v154 = vadd.f32 %v69, %v153
    %v155 = vpop.f32.mrb[0].mxu0
    %v156 = vpop.f32.mrb[0].mxu0
    %v157 = vpop.f32.mrb[0].mxu0
    %158 = vdwg.mxu0
    %v159 = vmax.f32 %v154, 0.0
    %v160 = vpack.c.bf16 %v159, %v159
    %s161 = scalar_lea.vmem [#allocation6], 64
    %v162 = vld [vmem:[%s161] sm:$0xf]
    %v163 = vld [vmem:[%s161 + $0x4] sm:$0xf]
    %v164 = vld [vmem:[%s161 + $0x8] sm:$0xf]
    %v165 = vld [vmem:[%s161 + $0xc] sm:$0xf]
    %v166 = vld [vmem:[%s161 + $0x10] sm:$0xf]
    %v167 = vld [vmem:[%s161 + $0x14] sm:$0xf]
    %v168 = vld [vmem:[%s161 + $0x18] sm:$0xf]
    %v169 = vld [vmem:[%s161 + $0x1c] sm:$0xf]
    %v170 = vld [vmem:[%s161 + $0x20] sm:$0xf]
    %v171 = vld [vmem:[%s161 + $0x24] sm:$0xf]
    %v172 = vld [vmem:[%s161 + $0x28] sm:$0xf]
    %v173 = vld [vmem:[%s161 + $0x2c] sm:$0xf]
    %v174 = vld [vmem:[%s161 + $0x30] sm:$0xf]
    %v175 = vld [vmem:[%s161 + $0x34] sm:$0xf]
    %v176 = vld [vmem:[%s161 + $0x38] sm:$0xf]
    %v177 = vld [vmem:[%s161 + $0x3c] sm:$0xf]
    %s178 = scalar_lea.vmem %s2, 1
    %v179 = vld [vmem:[%s178] sm:$0x1]
    %v181 = vlaneseq
    %v182 = vshrl.u32 %v181, 7
    %v183 = vsub.s32 0, %v182
    %v184 = vrot.slane %v179, %v183
    %v202 = vunpack.c.l.b16 %v162
    %v203 = vunpack.c.l.b16 %v163
    %v204 = vunpack.c.l.b16 %v164
    %v205 = vunpack.c.l.b16 %v165
    %v206 = vunpack.c.l.b16 %v166
    %v207 = vunpack.c.l.b16 %v167
    %v208 = vunpack.c.l.b16 %v168
    %v209 = vunpack.c.l.b16 %v169
    %v210 = vunpack.c.l.b16 %v170
    %v211 = vunpack.c.l.b16 %v171
    %v212 = vunpack.c.l.b16 %v172
    %v213 = vunpack.c.l.b16 %v173
    %v214 = vunpack.c.l.b16 %v174
    %v215 = vunpack.c.l.b16 %v175
    %v216 = vunpack.c.l.b16 %v176
    %v217 = vunpack.c.l.b16 %v177
    %v218 = vpack.c.b16 %v203, %v202
    %v219 = vpack.c.b16 %v205, %v204
    %v220 = vpack.c.b16 %v207, %v206
    %v221 = vpack.c.b16 %v209, %v208
    %v222 = vpack.c.b16 %v211, %v210
    %v223 = vpack.c.b16 %v213, %v212
    %v224 = vpack.c.b16 %v215, %v214
    %v225 = vpack.c.b16 %v217, %v216
    %234 = vmatprep.subr.bf16.mxu0 0
    %235 = vmatpush1.bf16.msra.mxu0 %v218
    %236 = vmatprep.subr.bf16.mxu0 0
    %237 = vmatpush1.bf16.msra.mxu0 %v219
    %238 = vmatprep.subr.bf16.mxu0 0
    %239 = vmatpush1.bf16.msra.mxu0 %v220
    %240 = vmatprep.subr.bf16.mxu0 0
    %241 = vmatpush1.bf16.msra.mxu0 %v221
    %242 = vmatprep.subr.bf16.mxu0 0
    %243 = vmatpush1.bf16.msra.mxu0 %v222
    %244 = vmatprep.subr.bf16.mxu0 0
    %245 = vmatpush1.bf16.msra.mxu0 %v223
    %246 = vmatprep.subr.bf16.mxu0 0
    %247 = vmatpush1.bf16.msra.mxu0 %v224
    %248 = vmatprep.subr.bf16.mxu0 0
    %249 = vmatpush1.bf16.msra.mxu0 %v225
    %250 = vmatprep.subr.bf16.mxu0 0
    %251 = vmatpush1.bf16.msra.mxu0 0
    %252 = vmatprep.subr.bf16.mxu0 0
    %253 = vmatpush1.bf16.msra.mxu0 0
    %254 = vmatprep.subr.bf16.mxu0 0
    %255 = vmatpush1.bf16.msra.mxu0 0
    %256 = vmatprep.subr.bf16.mxu0 0
    %257 = vmatpush1.bf16.msra.mxu0 0
    %258 = vmatprep.subr.bf16.mxu0 0
    %259 = vmatpush1.bf16.msra.mxu0 0
    %260 = vmatprep.subr.bf16.mxu0 0
    %261 = vmatpush1.bf16.msra.mxu0 0
    %262 = vmatprep.subr.bf16.mxu0 0
    %263 = vmatpush1.bf16.msra.mxu0 0
    %264 = vmatprep.subr.bf16.mxu0 0
    %265 = vmatpush1.bf16.msra.mxu0 0
    %266 = vmatprep.mubr.bf16.mxu0 0
    %267 = vmatmul.mubr.bf16.gmra.mrb[0].mxu0 %v160
    %v268 = vpop.f32.mrb[0].mxu0
    %v269 = vadd.f32 %v184, %v268
    %v270 = vpop.f32.mrb[0].mxu0
    %v271 = vpop.f32.mrb[0].mxu0
    %v272 = vpop.f32.mrb[0].mxu0
    %273 = vdwg.mxu0
    %v274 = vmax.f32 %v269, 0.0
    %v275 = vpack.c.bf16 %v274, %v274
    %s276 = scalar_lea.vmem [#allocation6], 128
    %v277 = vld [vmem:[%s276] sm:$0xf]
    %v278 = vld [vmem:[%s276 + $0x4] sm:$0xf]
    %v279 = vld [vmem:[%s276 + $0x8] sm:$0xf]
    %v280 = vld [vmem:[%s276 + $0xc] sm:$0xf]
    %v281 = vld [vmem:[%s276 + $0x10] sm:$0xf]
    %v282 = vld [vmem:[%s276 + $0x14] sm:$0xf]
    %v283 = vld [vmem:[%s276 + $0x18] sm:$0xf]
    %v284 = vld [vmem:[%s276 + $0x1c] sm:$0xf]
    %v285 = vld [vmem:[%s276 + $0x20] sm:$0xf]
    %v286 = vld [vmem:[%s276 + $0x24] sm:$0xf]
    %v287 = vld [vmem:[%s276 + $0x28] sm:$0xf]
    %v288 = vld [vmem:[%s276 + $0x2c] sm:$0xf]
    %v289 = vld [vmem:[%s276 + $0x30] sm:$0xf]
    %v290 = vld [vmem:[%s276 + $0x34] sm:$0xf]
    %v291 = vld [vmem:[%s276 + $0x38] sm:$0xf]
    %v292 = vld [vmem:[%s276 + $0x3c] sm:$0xf]
    %s293 = scalar_lea.vmem %s2, 2
    %v294 = vld [vmem:[%s293] sm:$0x1]
    %v296 = vlaneseq
    %v297 = vshrl.u32 %v296, 7
    %v298 = vsub.s32 0, %v297
    %v299 = vrot.slane %v294, %v298
    %v317 = vunpack.c.l.b16 %v277
    %v318 = vunpack.c.l.b16 %v278
    %v319 = vunpack.c.l.b16 %v279
    %v320 = vunpack.c.l.b16 %v280
    %v321 = vunpack.c.l.b16 %v281
    %v322 = vunpack.c.l.b16 %v282
    %v323 = vunpack.c.l.b16 %v283
    %v324 = vunpack.c.l.b16 %v284
    %v325 = vunpack.c.l.b16 %v285
    %v326 = vunpack.c.l.b16 %v286
    %v327 = vunpack.c.l.b16 %v287
    %v328 = vunpack.c.l.b16 %v288
    %v329 = vunpack.c.l.b16 %v289
    %v330 = vunpack.c.l.b16 %v290
    %v331 = vunpack.c.l.b16 %v291
    %v332 = vunpack.c.l.b16 %v292
    %v333 = vpack.c.b16 %v318, %v317
    %v334 = vpack.c.b16 %v320, %v319
    %v335 = vpack.c.b16 %v322, %v321
    %v336 = vpack.c.b16 %v324, %v323
    %v337 = vpack.c.b16 %v326, %v325
    %v338 = vpack.c.b16 %v328, %v327
    %v339 = vpack.c.b16 %v330, %v329
    %v340 = vpack.c.b16 %v332, %v331
    %349 = vmatprep.subr.bf16.mxu0 0
    %350 = vmatpush1.bf16.msra.mxu0 %v333
    %351 = vmatprep.subr.bf16.mxu0 0
    %352 = vmatpush1.bf16.msra.mxu0 %v334
    %353 = vmatprep.subr.bf16.mxu0 0
    %354 = vmatpush1.bf16.msra.mxu0 %v335
    %355 = vmatprep.subr.bf16.mxu0 0
    %356 = vmatpush1.bf16.msra.mxu0 %v336
    %357 = vmatprep.subr.bf16.mxu0 0
    %358 = vmatpush1.bf16.msra.mxu0 %v337
    %359 = vmatprep.subr.bf16.mxu0 0
    %360 = vmatpush1.bf16.msra.mxu0 %v338
    %361 = vmatprep.subr.bf16.mxu0 0
    %362 = vmatpush1.bf16.msra.mxu0 %v339
    %363 = vmatprep.subr.bf16.mxu0 0
    %364 = vmatpush1.bf16.msra.mxu0 %v340
    %365 = vmatprep.subr.bf16.mxu0 0
    %366 = vmatpush1.bf16.msra.mxu0 0
    %367 = vmatprep.subr.bf16.mxu0 0
    %368 = vmatpush1.bf16.msra.mxu0 0
    %369 = vmatprep.subr.bf16.mxu0 0
    %370 = vmatpush1.bf16.msra.mxu0 0
    %371 = vmatprep.subr.bf16.mxu0 0
    %372 = vmatpush1.bf16.msra.mxu0 0
    %373 = vmatprep.subr.bf16.mxu0 0
    %374 = vmatpush1.bf16.msra.mxu0 0
    %375 = vmatprep.subr.bf16.mxu0 0
    %376 = vmatpush1.bf16.msra.mxu0 0
    %377 = vmatprep.subr.bf16.mxu0 0
    %378 = vmatpush1.bf16.msra.mxu0 0
    %379 = vmatprep.subr.bf16.mxu0 0
    %380 = vmatpush1.bf16.msra.mxu0 0
    %381 = vmatprep.mubr.bf16.mxu0 0
    %382 = vmatmul.mubr.bf16.gmra.mrb[0].mxu0 %v275
    %v383 = vpop.f32.mrb[0].mxu0
    %v384 = vadd.f32 %v299, %v383
    %v385 = vpop.f32.mrb[0].mxu0
    %v386 = vpop.f32.mrb[0].mxu0
    %v387 = vpop.f32.mrb[0].mxu0
    %388 = vdwg.mxu0
    %v389 = vmax.f32 %v384, 0.0
    %v390 = vpack.c.bf16 %v389, %v389
    %s391 = scalar_lea.vmem [#allocation6], 192
    %v392 = vld [vmem:[%s391] sm:$0xf]
    %v393 = vld [vmem:[%s391 + $0x4] sm:$0xf]
    %v394 = vld [vmem:[%s391 + $0x8] sm:$0xf]
    %v395 = vld [vmem:[%s391 + $0xc] sm:$0xf]
    %v396 = vld [vmem:[%s391 + $0x10] sm:$0xf]
    %v397 = vld [vmem:[%s391 + $0x14] sm:$0xf]
    %v398 = vld [vmem:[%s391 + $0x18] sm:$0xf]
    %v399 = vld [vmem:[%s391 + $0x1c] sm:$0xf]
    %v400 = vld [vmem:[%s391 + $0x20] sm:$0xf]
    %v401 = vld [vmem:[%s391 + $0x24] sm:$0xf]
    %v402 = vld [vmem:[%s391 + $0x28] sm:$0xf]
    %v403 = vld [vmem:[%s391 + $0x2c] sm:$0xf]
    %v404 = vld [vmem:[%s391 + $0x30] sm:$0xf]
    %v405 = vld [vmem:[%s391 + $0x34] sm:$0xf]
    %v406 = vld [vmem:[%s391 + $0x38] sm:$0xf]
    %v407 = vld [vmem:[%s391 + $0x3c] sm:$0xf]
    %s408 = scalar_lea.vmem %s2, 3
    %v409 = vld [vmem:[%s408] sm:$0x1]
    %v411 = vlaneseq
    %v412 = vshrl.u32 %v411, 7
    %v413 = vsub.s32 0, %v412
    %v414 = vrot.slane %v409, %v413
    %v432 = vunpack.c.l.b16 %v392
    %v433 = vunpack.c.l.b16 %v393
    %v434 = vunpack.c.l.b16 %v394
    %v435 = vunpack.c.l.b16 %v395
    %v436 = vunpack.c.l.b16 %v396
    %v437 = vunpack.c.l.b16 %v397
    %v438 = vunpack.c.l.b16 %v398
    %v439 = vunpack.c.l.b16 %v399
    %v440 = vunpack.c.l.b16 %v400
    %v441 = vunpack.c.l.b16 %v401
    %v442 = vunpack.c.l.b16 %v402
    %v443 = vunpack.c.l.b16 %v403
    %v444 = vunpack.c.l.b16 %v404
    %v445 = vunpack.c.l.b16 %v405
    %v446 = vunpack.c.l.b16 %v406
    %v447 = vunpack.c.l.b16 %v407
    %v448 = vpack.c.b16 %v433, %v432
    %v449 = vpack.c.b16 %v435, %v434
    %v450 = vpack.c.b16 %v437, %v436
    %v451 = vpack.c.b16 %v439, %v438
    %v452 = vpack.c.b16 %v441, %v440
    %v453 = vpack.c.b16 %v443, %v442
    %v454 = vpack.c.b16 %v445, %v444
    %v455 = vpack.c.b16 %v447, %v446
    %464 = vmatprep.subr.bf16.mxu0 0
    %465 = vmatpush1.bf16.msra.mxu0 %v448
    %466 = vmatprep.subr.bf16.mxu0 0
    %467 = vmatpush1.bf16.msra.mxu0 %v449
    %468 = vmatprep.subr.bf16.mxu0 0
    %469 = vmatpush1.bf16.msra.mxu0 %v450
    %470 = vmatprep.subr.bf16.mxu0 0
    %471 = vmatpush1.bf16.msra.mxu0 %v451
    %472 = vmatprep.subr.bf16.mxu0 0
    %473 = vmatpush1.bf16.msra.mxu0 %v452
    %474 = vmatprep.subr.bf16.mxu0 0
    %475 = vmatpush1.bf16.msra.mxu0 %v453
    %476 = vmatprep.subr.bf16.mxu0 0
    %477 = vmatpush1.bf16.msra.mxu0 %v454
    %478 = vmatprep.subr.bf16.mxu0 0
    %479 = vmatpush1.bf16.msra.mxu0 %v455
    %480 = vmatprep.subr.bf16.mxu0 0
    %481 = vmatpush1.bf16.msra.mxu0 0
    %482 = vmatprep.subr.bf16.mxu0 0
    %483 = vmatpush1.bf16.msra.mxu0 0
    %484 = vmatprep.subr.bf16.mxu0 0
    %485 = vmatpush1.bf16.msra.mxu0 0
    %486 = vmatprep.subr.bf16.mxu0 0
    %487 = vmatpush1.bf16.msra.mxu0 0
    %488 = vmatprep.subr.bf16.mxu0 0
    %489 = vmatpush1.bf16.msra.mxu0 0
    %490 = vmatprep.subr.bf16.mxu0 0
    %491 = vmatpush1.bf16.msra.mxu0 0
    %492 = vmatprep.subr.bf16.mxu0 0
    %493 = vmatpush1.bf16.msra.mxu0 0
    %494 = vmatprep.subr.bf16.mxu0 0
    %495 = vmatpush1.bf16.msra.mxu0 0
    %496 = vmatprep.mubr.bf16.mxu0 0
    %497 = vmatmul.mubr.bf16.gmra.mrb[0].mxu0 %v390
    %v498 = vpop.f32.mrb[0].mxu0
    %v499 = vadd.f32 %v414, %v498
    %v500 = vpop.f32.mrb[0].mxu0
    %v501 = vpop.f32.mrb[0].mxu0
    %v502 = vpop.f32.mrb[0].mxu0
    %503 = vdwg.mxu0
    %v504 = vmax.f32 %v499, 0.0
    %v505 = vpack.c.bf16 %v504, %v504
    %s506 = scalar_lea.vmem [#allocation6], 256
    %v507 = vld [vmem:[%s506] sm:$0xf]
    %v508 = vld [vmem:[%s506 + $0x4] sm:$0xf]
    %v509 = vld [vmem:[%s506 + $0x8] sm:$0xf]
    %v510 = vld [vmem:[%s506 + $0xc] sm:$0xf]
    %v511 = vld [vmem:[%s506 + $0x10] sm:$0xf]
    %v512 = vld [vmem:[%s506 + $0x14] sm:$0xf]
    %v513 = vld [vmem:[%s506 + $0x18] sm:$0xf]
    %v514 = vld [vmem:[%s506 + $0x1c] sm:$0xf]
    %v515 = vld [vmem:[%s506 + $0x20] sm:$0xf]
    %v516 = vld [vmem:[%s506 + $0x24] sm:$0xf]
    %v517 = vld [vmem:[%s506 + $0x28] sm:$0xf]
    %v518 = vld [vmem:[%s506 + $0x2c] sm:$0xf]
    %v519 = vld [vmem:[%s506 + $0x30] sm:$0xf]
    %v520 = vld [vmem:[%s506 + $0x34] sm:$0xf]
    %v521 = vld [vmem:[%s506 + $0x38] sm:$0xf]
    %v522 = vld [vmem:[%s506 + $0x3c] sm:$0xf]
    %s523 = scalar_lea.vmem %s2, 4
    %v524 = vld [vmem:[%s523] sm:$0x1]
    %v526 = vlaneseq
    %v527 = vshrl.u32 %v526, 7
    %v528 = vsub.s32 0, %v527
    %v529 = vrot.slane %v524, %v528
    %v547 = vunpack.c.l.b16 %v507
    %v548 = vunpack.c.l.b16 %v508
    %v549 = vunpack.c.l.b16 %v509
    %v550 = vunpack.c.l.b16 %v510
    %v551 = vunpack.c.l.b16 %v511
    %v552 = vunpack.c.l.b16 %v512
    %v553 = vunpack.c.l.b16 %v513
    %v554 = vunpack.c.l.b16 %v514
    %v555 = vunpack.c.l.b16 %v515
    %v556 = vunpack.c.l.b16 %v516
    %v557 = vunpack.c.l.b16 %v517
    %v558 = vunpack.c.l.b16 %v518
    %v559 = vunpack.c.l.b16 %v519
    %v560 = vunpack.c.l.b16 %v520
    %v561 = vunpack.c.l.b16 %v521
    %v562 = vunpack.c.l.b16 %v522
    %v563 = vpack.c.b16 %v548, %v547
    %v564 = vpack.c.b16 %v550, %v549
    %v565 = vpack.c.b16 %v552, %v551
    %v566 = vpack.c.b16 %v554, %v553
    %v567 = vpack.c.b16 %v556, %v555
    %v568 = vpack.c.b16 %v558, %v557
    %v569 = vpack.c.b16 %v560, %v559
    %v570 = vpack.c.b16 %v562, %v561
    %579 = vmatprep.subr.bf16.mxu0 0
    %580 = vmatpush1.bf16.msra.mxu0 %v563
    %581 = vmatprep.subr.bf16.mxu0 0
    %582 = vmatpush1.bf16.msra.mxu0 %v564
    %583 = vmatprep.subr.bf16.mxu0 0
    %584 = vmatpush1.bf16.msra.mxu0 %v565
    %585 = vmatprep.subr.bf16.mxu0 0
    %586 = vmatpush1.bf16.msra.mxu0 %v566
    %587 = vmatprep.subr.bf16.mxu0 0
    %588 = vmatpush1.bf16.msra.mxu0 %v567
    %589 = vmatprep.subr.bf16.mxu0 0
    %590 = vmatpush1.bf16.msra.mxu0 %v568
    %591 = vmatprep.subr.bf16.mxu0 0
    %592 = vmatpush1.bf16.msra.mxu0 %v569
    %593 = vmatprep.subr.bf16.mxu0 0
    %594 = vmatpush1.bf16.msra.mxu0 %v570
    %595 = vmatprep.subr.bf16.mxu0 0
    %596 = vmatpush1.bf16.msra.mxu0 0
    %597 = vmatprep.subr.bf16.mxu0 0
    %598 = vmatpush1.bf16.msra.mxu0 0
    %599 = vmatprep.subr.bf16.mxu0 0
    %600 = vmatpush1.bf16.msra.mxu0 0
    %601 = vmatprep.subr.bf16.mxu0 0
    %602 = vmatpush1.bf16.msra.mxu0 0
    %603 = vmatprep.subr.bf16.mxu0 0
    %604 = vmatpush1.bf16.msra.mxu0 0
    %605 = vmatprep.subr.bf16.mxu0 0
    %606 = vmatpush1.bf16.msra.mxu0 0
    %607 = vmatprep.subr.bf16.mxu0 0
    %608 = vmatpush1.bf16.msra.mxu0 0
    %609 = vmatprep.subr.bf16.mxu0 0
    %610 = vmatpush1.bf16.msra.mxu0 0
    %611 = vmatprep.mubr.bf16.mxu0 0
    %612 = vmatmul.mubr.bf16.gmra.mrb[0].mxu0 %v505
    %v613 = vpop.f32.mrb[0].mxu0
    %v614 = vadd.f32 %v529, %v613
    %v615 = vpop.f32.mrb[0].mxu0
    %v616 = vpop.f32.mrb[0].mxu0
    %v617 = vpop.f32.mrb[0].mxu0
    %618 = vdwg.mxu0
    %v619 = vmax.f32 %v614, 0.0
    %v620 = vpack.c.bf16 %v619, %v619
    %s621 = scalar_lea.vmem [#allocation6], 320
    %v622 = vld [vmem:[%s621] sm:$0xf]
    %v623 = vld [vmem:[%s621 + $0x4] sm:$0xf]
    %v624 = vld [vmem:[%s621 + $0x8] sm:$0xf]
    %v625 = vld [vmem:[%s621 + $0xc] sm:$0xf]
    %v626 = vld [vmem:[%s621 + $0x10] sm:$0xf]
    %v627 = vld [vmem:[%s621 + $0x14] sm:$0xf]
    %v628 = vld [vmem:[%s621 + $0x18] sm:$0xf]
    %v629 = vld [vmem:[%s621 + $0x1c] sm:$0xf]
    %v630 = vld [vmem:[%s621 + $0x20] sm:$0xf]
    %v631 = vld [vmem:[%s621 + $0x24] sm:$0xf]
    %v632 = vld [vmem:[%s621 + $0x28] sm:$0xf]
    %v633 = vld [vmem:[%s621 + $0x2c] sm:$0xf]
    %v634 = vld [vmem:[%s621 + $0x30] sm:$0xf]
    %v635 = vld [vmem:[%s621 + $0x34] sm:$0xf]
    %v636 = vld [vmem:[%s621 + $0x38] sm:$0xf]
    %v637 = vld [vmem:[%s621 + $0x3c] sm:$0xf]
    %s638 = scalar_lea.vmem %s2, 5
    %v639 = vld [vmem:[%s638] sm:$0x1]
    %v641 = vlaneseq
    %v642 = vshrl.u32 %v641, 7
    %v643 = vsub.s32 0, %v642
    %v644 = vrot.slane %v639, %v643
    %v662 = vunpack.c.l.b16 %v622
    %v663 = vunpack.c.l.b16 %v623
    %v664 = vunpack.c.l.b16 %v624
    %v665 = vunpack.c.l.b16 %v625
    %v666 = vunpack.c.l.b16 %v626
    %v667 = vunpack.c.l.b16 %v627
    %v668 = vunpack.c.l.b16 %v628
    %v669 = vunpack.c.l.b16 %v629
    %v670 = vunpack.c.l.b16 %v630
    %v671 = vunpack.c.l.b16 %v631
    %v672 = vunpack.c.l.b16 %v632
    %v673 = vunpack.c.l.b16 %v633
    %v674 = vunpack.c.l.b16 %v634
    %v675 = vunpack.c.l.b16 %v635
    %v676 = vunpack.c.l.b16 %v636
    %v677 = vunpack.c.l.b16 %v637
    %v678 = vpack.c.b16 %v663, %v662
    %v679 = vpack.c.b16 %v665, %v664
    %v680 = vpack.c.b16 %v667, %v666
    %v681 = vpack.c.b16 %v669, %v668
    %v682 = vpack.c.b16 %v671, %v670
    %v683 = vpack.c.b16 %v673, %v672
    %v684 = vpack.c.b16 %v675, %v674
    %v685 = vpack.c.b16 %v677, %v676
    %694 = vmatprep.subr.bf16.mxu0 0
    %695 = vmatpush1.bf16.msra.mxu0 %v678
    %696 = vmatprep.subr.bf16.mxu0 0
    %697 = vmatpush1.bf16.msra.mxu0 %v679
    %698 = vmatprep.subr.bf16.mxu0 0
    %699 = vmatpush1.bf16.msra.mxu0 %v680
    %700 = vmatprep.subr.bf16.mxu0 0
    %701 = vmatpush1.bf16.msra.mxu0 %v681
    %702 = vmatprep.subr.bf16.mxu0 0
    %703 = vmatpush1.bf16.msra.mxu0 %v682
    %704 = vmatprep.subr.bf16.mxu0 0
    %705 = vmatpush1.bf16.msra.mxu0 %v683
    %706 = vmatprep.subr.bf16.mxu0 0
    %707 = vmatpush1.bf16.msra.mxu0 %v684
    %708 = vmatprep.subr.bf16.mxu0 0
    %709 = vmatpush1.bf16.msra.mxu0 %v685
    %710 = vmatprep.subr.bf16.mxu0 0
    %711 = vmatpush1.bf16.msra.mxu0 0
    %712 = vmatprep.subr.bf16.mxu0 0
    %713 = vmatpush1.bf16.msra.mxu0 0
    %714 = vmatprep.subr.bf16.mxu0 0
    %715 = vmatpush1.bf16.msra.mxu0 0
    %716 = vmatprep.subr.bf16.mxu0 0
    %717 = vmatpush1.bf16.msra.mxu0 0
    %718 = vmatprep.subr.bf16.mxu0 0
    %719 = vmatpush1.bf16.msra.mxu0 0
    %720 = vmatprep.subr.bf16.mxu0 0
    %721 = vmatpush1.bf16.msra.mxu0 0
    %722 = vmatprep.subr.bf16.mxu0 0
    %723 = vmatpush1.bf16.msra.mxu0 0
    %724 = vmatprep.subr.bf16.mxu0 0
    %725 = vmatpush1.bf16.msra.mxu0 0
    %726 = vmatprep.mubr.bf16.mxu0 0
    %727 = vmatmul.mubr.bf16.gmra.mrb[0].mxu0 %v620
    %v728 = vpop.f32.mrb[0].mxu0
    %v729 = vadd.f32 %v644, %v728
    %v730 = vpop.f32.mrb[0].mxu0
    %v731 = vpop.f32.mrb[0].mxu0
    %v732 = vpop.f32.mrb[0].mxu0
    %733 = vdwg.mxu0
    %vm734 = vcmask 50176
    %735 = vst.msk [vmem:[#allocation8] sm:$0x3] %vm734, %v729
    // Predicated region
    $region22: #{tpu_custom_call.1} parent=1 // pred_check
      _
    $region23: #{tpu_custom_call.1} parent=1 // pred_check_branch
      %737 = sbr.rel (0) target = $region25
    $region24: #{tpu_custom_call.1} parent=1 // pred_region
      %s739 = ssub.s32 32, 32
      %740 = vsyncadd [#allocation5], %s739
      %s742 = sshll.u32 [#allocation8], 4
      %s743 = int_to_ptr.vmem [resolvable:$true] %s742
      %745 = dma.vmem_to_hbm [thread:$0]  %s743, 32, %s3, [#allocation5]
    $region25: #{tpu_custom_call.1} parent=1 // pred_fallthru
      _
    // Predicated region
    $region26: #{tpu_custom_call.1} parent=1 // pred_check
      _
    $region27: #{tpu_custom_call.1} parent=1 // pred_check_branch
      %747 = sbr.rel (0) target = $region29
    $region28: #{tpu_custom_call.1} parent=1 // pred_region
      %748 = dma.done [#allocation5], 32
    $region29: #{tpu_custom_call.1} parent=1 // pred_fallthru
      _
    %749 = vsyncpa [#allocation4], 1
    %750 = vsyncpa [#allocation7], 1
    %751 = vsyncpa [#allocation5], 1

</llo_original>
